<compile_context>
chip_gen: v5e
topology: v5e:2x2
jax: 0.10.0
libtpu: 0.0.40
codegen_flags: <defaults>
</compile_context>

<pallas_src>
import functools

import jax
import jax.numpy as jnp
from jax.experimental import pallas as pl
from jax.experimental.pallas import tpu as pltpu


def _round_up(n, m):
    return ((n + m - 1) // m) * m


def _dqn_mlp_kernel(x_ref, w1_ref, b1_ref, w2_ref, b2_ref, w3_ref, b3_ref, o_ref):
    # One (tile_b, *) slab of the batch; weights/biases are resident across grid steps.
    x = x_ref[...].astype(jnp.bfloat16)                              # per-tile f32->bf16 cast

    h1 = jnp.dot(x, w1_ref[...], preferred_element_type=jnp.float32) + b1_ref[...]
    h1 = jnp.maximum(h1, 0.0).astype(jnp.bfloat16)                   # f32 epilogue, bf16 operand

    h2 = jnp.dot(h1, w2_ref[...], preferred_element_type=jnp.float32) + b2_ref[...]
    h2 = jnp.maximum(h2, 0.0).astype(jnp.bfloat16)

    out = jnp.dot(h2, w3_ref[...], preferred_element_type=jnp.float32) + b3_ref[...]
    o_ref[...] = out.astype(o_ref.dtype)                             # lane-dense bf16 store


@functools.partial(jax.jit, static_argnames=("block_b", "min_steps"))
def dqn_forward(x, params, *, block_b=2048, min_steps=2):
    """x: (B, input_size) float32. params: w1,w2,w3 bf16 (in,out); b1,b2,b3 f32 (1,out)."""
    w1, b1, w2, b2, w3, b3 = (params[k] for k in ("w1", "b1", "w2", "b2", "w3", "b3"))
    B, in_size = x.shape
    hidden = w1.shape[1]
    out_size = w3.shape[1]

    # Adaptive batch tiling: fewest fat tiles (<= block_b rows), tile a multiple of 16
    # (bf16 sublane packing). Keep >= min_steps grid steps when the batch is big enough
    # so the "parallel" axis can be split across v7x's two TensorCores.
    num_tiles = pl.cdiv(B, block_b)
    if B >= 2 * 16 and num_tiles < min_steps:
        num_tiles = min_steps
    tile_b = _round_up(pl.cdiv(B, num_tiles), 16)
    padded_b = num_tiles * tile_b

    # Lane-dense output: pad the last layer to a multiple of 128 columns (skip if aligned).
    out_p = _round_up(out_size, 128)
    if out_p != out_size:
        w3p = jnp.pad(w3, ((0, 0), (0, out_p - out_size)))
        b3p = jnp.pad(b3, ((0, 0), (0, out_p - out_size)))
    else:
        w3p, b3p = w3, b3

    # Only pad the batch when the tile doesn't divide it (no dtype-cast pre-pass on x).
    x_in = x if padded_b == B else jnp.pad(x, ((0, padded_b - B), (0, 0)))

    grid = (num_tiles,)
    batch_spec = lambda shape: pl.BlockSpec(shape, lambda i: (i, 0))
    const_spec = lambda shape: pl.BlockSpec(shape, lambda i: (0, 0))

    flops = 2 * padded_b * (in_size * hidden + hidden * hidden + hidden * out_p)
    bytes_accessed = (
        padded_b * in_size * 4                         # x (f32 in HBM)
        + (w1.size + w2.size + w3p.size) * 2           # bf16 weights (resident)
        + (b1.size + b2.size + b3p.size) * 4           # f32 biases
        + padded_b * out_p * 2                         # bf16 output writeback
    )

    out_padded = pl.pallas_call(
        _dqn_mlp_kernel,
        out_shape=jax.ShapeDtypeStruct((padded_b, out_p), jnp.bfloat16),
        grid=grid,
        in_specs=[
            batch_spec((tile_b, in_size)),
            const_spec(w1.shape), const_spec(b1.shape),
            const_spec(w2.shape), const_spec(b2.shape),
            const_spec(w3p.shape), const_spec(b3p.shape),
        ],
        out_specs=batch_spec((tile_b, out_p)),
        compiler_params=pltpu.CompilerParams(
            # "parallel" is safe on all generations; on v7x, A/B against
            # pltpu.CORE_PARALLEL for the explicit 2-TensorCore split.
            dimension_semantics=("parallel",),
        ),
        cost_estimate=pl.CostEstimate(
            flops=flops, transcendentals=0, bytes_accessed=bytes_accessed
        ),
    )(x_in, w1, b1, w2, b2, w3p, b3p)

    # Tiny slice/cast back to logical shape + f32 (B x out_size elements only).
    return out_padded[:B, :out_size].astype(jnp.float32)


def init_dqn_params(key, input_size, output_size, hidden_size=128):
    """Deterministic init mimicking PyTorch nn.Linear default (uniform +-1/sqrt(fan_in)).
    Weights stored bf16 (MXU operands), biases f32 (VPU epilogue)."""
    ks = jax.random.split(key, 6)

    def linear(kw, kb, fan_in, fan_out):
        bound = 1.0 / jnp.sqrt(jnp.float32(fan_in))
        w = jax.random.uniform(kw, (fan_in, fan_out), jnp.float32, -bound, bound)
        b = jax.random.uniform(kb, (1, fan_out), jnp.float32, -bound, bound)
        return w.astype(jnp.bfloat16), b

    w1, b1 = linear(ks[0], ks[1], input_size, hidden_size)
    w2, b2 = linear(ks[2], ks[3], hidden_size, hidden_size)
    w3, b3 = linear(ks[4], ks[5], hidden_size, output_size)
    return {"w1": w1, "b1": b1, "w2": w2, "b2": b2, "w3": w3, "b3": b3}


def _reference_forward(x, p):
    # Same numerics as the kernel: bf16 matmul operands, f32 accumulate/bias/ReLU,
    # final result rounded to bf16 (kernel output dtype) then widened to f32.
    xb = x.astype(jnp.bfloat16)
    h1 = jnp.maximum(
        jnp.dot(xb, p["w1"], preferred_element_type=jnp.float32) + p["b1"], 0.0)
    h2 = jnp.maximum(
        jnp.dot(h1.astype(jnp.bfloat16), p["w2"], preferred_element_type=jnp.float32) + p["b2"], 0.0)
    out = jnp.dot(h2.astype(jnp.bfloat16), p["w3"], preferred_element_type=jnp.float32) + p["b3"]
    return out.astype(jnp.bfloat16).astype(jnp.float32)


if __name__ == "__main__":
    key = jax.random.PRNGKey(0)
    k_param, k_x = jax.random.split(key)

    batch, input_size, hidden_size, output_size = 2, 8, 128, 4
    params = init_dqn_params(k_param, input_size, output_size, hidden_size)
    x = jax.random.normal(k_x, (batch, input_size), jnp.float32)

    out = jax.block_until_ready(dqn_forward(x, params))
    ref = _reference_forward(x, params)
    assert out.shape == (batch, output_size)
    assert jnp.allclose(out, ref, atol=2e-2, rtol=2e-2), "mismatch vs pure-JAX reference"

    # Also exercise a realistic multi-tile batch (hits the >=2-step pipelined path).
    big_b = 1000
    xb = jax.random.normal(jax.random.PRNGKey(1), (big_b, input_size), jnp.float32)
    out_big = jax.block_until_ready(dqn_forward(xb, params))
    ref_big = _reference_forward(xb, params)
    assert out_big.shape == (big_b, output_size)
    assert jnp.allclose(out_big, ref_big, atol=2e-2, rtol=2e-2), "mismatch (big batch)"

    print("KERNEL_OK")
</pallas_src>

<mosaic_0001>
module attributes {stable_mosaic.version = 11 : i64} {
  func.func @_dqn_mlp_kernel(%arg0: i32, %arg1: memref<16x8xf32, #tpu.memory_space<vmem>>, %arg2: memref<8x128xbf16, #tpu.memory_space<vmem>>, %arg3: memref<1x128xf32, #tpu.memory_space<vmem>>, %arg4: memref<128x128xbf16, #tpu.memory_space<vmem>>, %arg5: memref<1x128xf32, #tpu.memory_space<vmem>>, %arg6: memref<128x128xbf16, #tpu.memory_space<vmem>>, %arg7: memref<1x128xf32, #tpu.memory_space<vmem>>, %arg8: memref<16x128xbf16, #tpu.memory_space<vmem>>) attributes {dimension_semantics = [#tpu.dimension_semantics<parallel>], iteration_bounds = array<i64: 1>, scalar_prefetch = 0 : i64, scratch_operands = 0 : i64, tpu.core_type = #tpu.core_type<tc>, window_params = [{transform_indices = @transform_0, window_bounds = array<i64: 16, 8>}, {pipeline_mode = #tpu.pipeline_mode<synchronous>, transform_indices = @transform_1, window_bounds = array<i64: 8, 128>}, {pipeline_mode = #tpu.pipeline_mode<synchronous>, transform_indices = @transform_2, window_bounds = array<i64: 1, 128>}, {pipeline_mode = #tpu.pipeline_mode<synchronous>, transform_indices = @transform_3, window_bounds = array<i64: 128, 128>}, {pipeline_mode = #tpu.pipeline_mode<synchronous>, transform_indices = @transform_4, window_bounds = array<i64: 1, 128>}, {pipeline_mode = #tpu.pipeline_mode<synchronous>, transform_indices = @transform_5, window_bounds = array<i64: 128, 128>}, {pipeline_mode = #tpu.pipeline_mode<synchronous>, transform_indices = @transform_6, window_bounds = array<i64: 1, 128>}, {transform_indices = @transform_7, window_bounds = array<i64: 16, 128>}]} {
    %c0 = arith.constant 0 : index
    %c0_0 = arith.constant 0 : index
    %0 = vector.load %arg1[%c0, %c0_0] : memref<16x8xf32, #tpu.memory_space<vmem>>, vector<16x8xf32>
    %1 = arith.truncf %0 : vector<16x8xf32> to vector<16x8xbf16>
    %c0_1 = arith.constant 0 : index
    %c0_2 = arith.constant 0 : index
    %2 = vector.load %arg2[%c0_1, %c0_2] : memref<8x128xbf16, #tpu.memory_space<vmem>>, vector<8x128xbf16>
    %cst = arith.constant dense<0.000000e+00> : vector<16x128xf32>
    %3 = tpu.matmul %1, %2, %cst {dimension_numbers = #tpu.dot_dimension_numbers<[1], [0], [0], [1], [0, 0, 1, 1], [], []>} : vector<16x8xbf16>, vector<8x128xbf16>, vector<16x128xf32> -> vector<16x128xf32>
    %c0_3 = arith.constant 0 : index
    %c0_4 = arith.constant 0 : index
    %4 = vector.load %arg3[%c0_3, %c0_4] : memref<1x128xf32, #tpu.memory_space<vmem>>, vector<1x128xf32>
    %5 = vector.broadcast %4 : vector<1x128xf32> to vector<16x128xf32>
    %6 = arith.addf %3, %5 : vector<16x128xf32>
    %cst_5 = arith.constant 0.000000e+00 : f32
    %7 = vector.broadcast %cst_5 : f32 to vector<16x128xf32>
    %8 = arith.maximumf %6, %7 : vector<16x128xf32>
    %9 = arith.truncf %8 : vector<16x128xf32> to vector<16x128xbf16>
    %c0_6 = arith.constant 0 : index
    %c0_7 = arith.constant 0 : index
    %10 = vector.load %arg4[%c0_6, %c0_7] : memref<128x128xbf16, #tpu.memory_space<vmem>>, vector<128x128xbf16>
    %cst_8 = arith.constant dense<0.000000e+00> : vector<16x128xf32>
    %11 = tpu.matmul %9, %10, %cst_8 {dimension_numbers = #tpu.dot_dimension_numbers<[1], [0], [0], [1], [0, 0, 1, 1], [], []>} : vector<16x128xbf16>, vector<128x128xbf16>, vector<16x128xf32> -> vector<16x128xf32>
    %c0_9 = arith.constant 0 : index
    %c0_10 = arith.constant 0 : index
    %12 = vector.load %arg5[%c0_9, %c0_10] : memref<1x128xf32, #tpu.memory_space<vmem>>, vector<1x128xf32>
    %13 = vector.broadcast %12 : vector<1x128xf32> to vector<16x128xf32>
    %14 = arith.addf %11, %13 : vector<16x128xf32>
    %cst_11 = arith.constant 0.000000e+00 : f32
    %15 = vector.broadcast %cst_11 : f32 to vector<16x128xf32>
    %16 = arith.maximumf %14, %15 : vector<16x128xf32>
    %17 = arith.truncf %16 : vector<16x128xf32> to vector<16x128xbf16>
    %c0_12 = arith.constant 0 : index
    %c0_13 = arith.constant 0 : index
    %18 = vector.load %arg6[%c0_12, %c0_13] : memref<128x128xbf16, #tpu.memory_space<vmem>>, vector<128x128xbf16>
    %cst_14 = arith.constant dense<0.000000e+00> : vector<16x128xf32>
    %19 = tpu.matmul %17, %18, %cst_14 {dimension_numbers = #tpu.dot_dimension_numbers<[1], [0], [0], [1], [0, 0, 1, 1], [], []>} : vector<16x128xbf16>, vector<128x128xbf16>, vector<16x128xf32> -> vector<16x128xf32>
    %c0_15 = arith.constant 0 : index
    %c0_16 = arith.constant 0 : index
    %20 = vector.load %arg7[%c0_15, %c0_16] : memref<1x128xf32, #tpu.memory_space<vmem>>, vector<1x128xf32>
    %21 = vector.broadcast %20 : vector<1x128xf32> to vector<16x128xf32>
    %22 = arith.addf %19, %21 : vector<16x128xf32>
    %23 = arith.truncf %22 : vector<16x128xf32> to vector<16x128xbf16>
    %c0_17 = arith.constant 0 : index
    %c0_18 = arith.constant 0 : index
    %24 = vector.load %arg8[%c0_17, %c0_18] : memref<16x128xbf16, #tpu.memory_space<vmem>>, vector<16x128xbf16>
    tpu.vector_store %arg8[%c0_17, %c0_18], %23 {strides = array<i32>} : memref<16x128xbf16, #tpu.memory_space<vmem>>, vector<16x128xbf16>,
    return
  }
  func.func @transform_0(%arg0: i32) -> (i32, i32) {
    %c0_i32 = arith.constant 0 : i32
    %c0_i32_0 = arith.constant 0 : i32
    return %arg0, %c0_i32 : i32, i32
  }
  func.func @transform_1(%arg0: i32) -> (i32, i32) {
    %c0_i32 = arith.constant 0 : i32
    %c0_i32_0 = arith.constant 0 : i32
    %c0_i32_1 = arith.constant 0 : i32
    return %c0_i32, %c0_i32_0 : i32, i32
  }
  func.func @transform_2(%arg0: i32) -> (i32, i32) {
    %c0_i32 = arith.constant 0 : i32
    %c0_i32_0 = arith.constant 0 : i32
    %c0_i32_1 = arith.constant 0 : i32
    return %c0_i32, %c0_i32_0 : i32, i32
  }
  func.func @transform_3(%arg0: i32) -> (i32, i32) {
    %c0_i32 = arith.constant 0 : i32
    %c0_i32_0 = arith.constant 0 : i32
    %c0_i32_1 = arith.constant 0 : i32
    return %c0_i32, %c0_i32_0 : i32, i32
  }
  func.func @transform_4(%arg0: i32) -> (i32, i32) {
    %c0_i32 = arith.constant 0 : i32
    %c0_i32_0 = arith.constant 0 : i32
    %c0_i32_1 = arith.constant 0 : i32
    return %c0_i32, %c0_i32_0 : i32, i32
  }
  func.func @transform_5(%arg0: i32) -> (i32, i32) {
    %c0_i32 = arith.constant 0 : i32
    %c0_i32_0 = arith.constant 0 : i32
    %c0_i32_1 = arith.constant 0 : i32
    return %c0_i32, %c0_i32_0 : i32, i32
  }
  func.func @transform_6(%arg0: i32) -> (i32, i32) {
    %c0_i32 = arith.constant 0 : i32
    %c0_i32_0 = arith.constant 0 : i32
    %c0_i32_1 = arith.constant 0 : i32
    return %c0_i32, %c0_i32_0 : i32, i32
  }
  func.func @transform_7(%arg0: i32) -> (i32, i32) {
    %c0_i32 = arith.constant 0 : i32
    %c0_i32_0 = arith.constant 0 : i32
    return %arg0, %c0_i32 : i32, i32
  }
}

</mosaic_0001>

<llo_original>
// kernel: dqn_forward.1
$region0: #{dqn_forward.1}
  #allocation0 [shape = 'u32[]', space=smem, size = 0x4, offset = 0x4, fixed_abs, tag = 'smem constant byte address 0x4 - core index']
  #allocation1 [shape = 'u32[72,128]{1,0:T(1,128)}', space=vmem, size = 0x9000, scoped, tag = 'internal scratch']
  %s0 = inlined_call_operand.vmem [shape: f32[16,8], index: 0, kind: input, shape index: {}]
  %s1 = inlined_call_operand.vmem [shape: bf16[8,128], index: 1, kind: input, shape index: {}]
  %s2 = inlined_call_operand.vmem [shape: f32[1,128], index: 2, kind: input, shape index: {}]
  %s3 = inlined_call_operand.vmem [shape: bf16[128,128], index: 3, kind: input, shape index: {}]
  %s4 = inlined_call_operand.vmem [shape: f32[1,128], index: 4, kind: input, shape index: {}]
  %s5 = inlined_call_operand.vmem [shape: bf16[128,128], index: 5, kind: input, shape index: {}]
  %s6 = inlined_call_operand.vmem [shape: f32[1,128], index: 6, kind: input, shape index: {}]
  %s7 = inlined_call_operand.vmem [shape: bf16[16,128], index: 7, kind: output, shape index: {}]
  %s8 = sld [smem:[#allocation0]]
  $region38: #{dqn_forward.1} parent=0
    _
  %s10 = ssub.s32 1, %s8
  %s11 = scalar_select 0, %s10, %s8
  // Predicated region
  $region2: #{dqn_forward.1} parent=0 // pred_check
    _
  $region3: #{dqn_forward.1} parent=0 // pred_check_branch
    %13 = sbr.rel (0) target = $region5
  $region4: #{dqn_forward.1} parent=0 // pred_region
    _
  $region5: #{dqn_forward.1} parent=0 // pred_fallthru
    _
  // Predicated region
  $region6: #{dqn_forward.1} parent=0 // pred_check
    _
  $region7: #{dqn_forward.1} parent=0 // pred_check_branch
    %15 = sbr.rel (0) target = $region9
  $region8: #{dqn_forward.1} parent=0 // pred_region
    _
  $region9: #{dqn_forward.1} parent=0 // pred_fallthru
    _
  // Predicated region
  $region10: #{dqn_forward.1} parent=0 // pred_check
    _
  $region11: #{dqn_forward.1} parent=0 // pred_check_branch
    %17 = sbr.rel (0) target = $region13
  $region12: #{dqn_forward.1} parent=0 // pred_region
    _
  $region13: #{dqn_forward.1} parent=0 // pred_fallthru
    _
  // Predicated region
  $region14: #{dqn_forward.1} parent=0 // pred_check
    _
  $region15: #{dqn_forward.1} parent=0 // pred_check_branch
    %19 = sbr.rel (0) target = $region17
  $region16: #{dqn_forward.1} parent=0 // pred_region
    _
  $region17: #{dqn_forward.1} parent=0 // pred_fallthru
    _
  // Predicated region
  $region18: #{dqn_forward.1} parent=0 // pred_check
    _
  $region19: #{dqn_forward.1} parent=0 // pred_check_branch
    %21 = sbr.rel (0) target = $region21
  $region20: #{dqn_forward.1} parent=0 // pred_region
    _
  $region21: #{dqn_forward.1} parent=0 // pred_fallthru
    _
  // Predicated region
  $region22: #{dqn_forward.1} parent=0 // pred_check
    _
  $region23: #{dqn_forward.1} parent=0 // pred_check_branch
    %23 = sbr.rel (0) target = $region25
  $region24: #{dqn_forward.1} parent=0 // pred_region
    _
  $region25: #{dqn_forward.1} parent=0 // pred_fallthru
    _
  // Predicated region
  $region26: #{dqn_forward.1} parent=0 // pred_check
    _
  $region27: #{dqn_forward.1} parent=0 // pred_check_branch
    %25 = sbr.rel (0) target = $region29
  $region28: #{dqn_forward.1} parent=0 // pred_region
    _
  $region29: #{dqn_forward.1} parent=0 // pred_fallthru
    _
  %v27 = vld [vmem:[%s0] sm:$0xff]
  %v28 = vld [vmem:[%s0 + $0x8] sm:$0xff]
  %v29 = vpack.c.bf16 %v28, %v27
  %v30 = vld [vmem:[%s1] sm:$0xf]
  %v31 = vld [vmem:[%s2] sm:$0x1]
  %v33 = vperm.slane %v31, 0
  %vm35 = vcmask 64512
  %v37 = vsel %vm35, %v29, 0
  %vm39 = vcmask 1043456
  %v41 = vsel %vm39, %v30, 0
  %43 = vmatpush.bf16.msra.mxu0 0
  %44 = vmatpush.bf16.msra.mxu0 0
  %45 = vmatpush.bf16.msra.mxu0 0
  %46 = vmatpush.bf16.msra.mxu0 0
  %47 = vmatpush.bf16.msra.mxu0 0
  %48 = vmatpush.bf16.msra.mxu0 0
  %49 = vmatpush.bf16.msra.mxu0 0
  %50 = vmatpush.bf16.msra.mxu0 %v41
  %51 = vmatmul.bf16.gmra.mxu0 %v37
  %v52 = vpop.f32.mrf.mxu0
  %v53 = vadd.f32 %v33, %v52
  %v54 = vpop.f32.mrf.mxu0
  %v55 = vadd.f32 %v33, %v54
  %56 = vdwg.mxu0
  %v57 = vmax.f32 %v53, 0.0
  %v58 = vmax.f32 %v55, 0.0
  %v59 = vpack.c.bf16 %v58, %v57
  %v60 = vld [vmem:[%s3] sm:$0xf]
  %v61 = vld [vmem:[%s3 + $0x4] sm:$0xf]
  %v62 = vld [vmem:[%s3 + $0x8] sm:$0xf]
  %v63 = vld [vmem:[%s3 + $0xc] sm:$0xf]
  %v64 = vld [vmem:[%s3 + $0x10] sm:$0xf]
  %v65 = vld [vmem:[%s3 + $0x14] sm:$0xf]
  %v66 = vld [vmem:[%s3 + $0x18] sm:$0xf]
  %v67 = vld [vmem:[%s3 + $0x1c] sm:$0xf]
  %v68 = vld [vmem:[%s3 + $0x20] sm:$0xf]
  %v69 = vld [vmem:[%s3 + $0x24] sm:$0xf]
  %v70 = vld [vmem:[%s3 + $0x28] sm:$0xf]
  %v71 = vld [vmem:[%s3 + $0x2c] sm:$0xf]
  %v72 = vld [vmem:[%s3 + $0x30] sm:$0xf]
  %v73 = vld [vmem:[%s3 + $0x34] sm:$0xf]
  %v74 = vld [vmem:[%s3 + $0x38] sm:$0xf]
  %v75 = vld [vmem:[%s3 + $0x3c] sm:$0xf]
  %v76 = vld [vmem:[%s4] sm:$0x1]
  %v78 = vperm.slane %v76, 0
  %v96 = vunpack.c.l.b16 %v60
  %v97 = vunpack.c.l.b16 %v61
  %v98 = vunpack.c.l.b16 %v62
  %v99 = vunpack.c.l.b16 %v63
  %v100 = vunpack.c.l.b16 %v64
  %v101 = vunpack.c.l.b16 %v65
  %v102 = vunpack.c.l.b16 %v66
  %v103 = vunpack.c.l.b16 %v67
  %v104 = vunpack.c.l.b16 %v68
  %v105 = vunpack.c.l.b16 %v69
  %v106 = vunpack.c.l.b16 %v70
  %v107 = vunpack.c.l.b16 %v71
  %v108 = vunpack.c.l.b16 %v72
  %v109 = vunpack.c.l.b16 %v73
  %v110 = vunpack.c.l.b16 %v74
  %v111 = vunpack.c.l.b16 %v75
  %v112 = vpack.c.b16 %v97, %v96
  %v113 = vpack.c.b16 %v99, %v98
  %v114 = vpack.c.b16 %v101, %v100
  %v115 = vpack.c.b16 %v103, %v102
  %v116 = vpack.c.b16 %v105, %v104
  %v117 = vpack.c.b16 %v107, %v106
  %v118 = vpack.c.b16 %v109, %v108
  %v119 = vpack.c.b16 %v111, %v110
  %128 = vmatpush.bf16.msra.mxu0 %v119
  %129 = vmatpush.bf16.msra.mxu0 %v118
  %130 = vmatpush.bf16.msra.mxu0 %v117
  %131 = vmatpush.bf16.msra.mxu0 %v116
  %132 = vmatpush.bf16.msra.mxu0 %v115
  %133 = vmatpush.bf16.msra.mxu0 %v114
  %134 = vmatpush.bf16.msra.mxu0 %v113
  %135 = vmatpush.bf16.msra.mxu0 %v112
  %136 = vmatmul.bf16.gmra.mxu0 %v59
  %v137 = vpop.f32.mrf.mxu0
  %v138 = vadd.f32 %v78, %v137
  %v139 = vpop.f32.mrf.mxu0
  %v140 = vadd.f32 %v78, %v139
  %141 = vdwg.mxu0
  %v142 = vmax.f32 %v138, 0.0
  %v143 = vmax.f32 %v140, 0.0
  %v144 = vpack.c.bf16 %v143, %v142
  %v145 = vld [vmem:[%s5] sm:$0xf]
  %v146 = vld [vmem:[%s5 + $0x4] sm:$0xf]
  %v147 = vld [vmem:[%s5 + $0x8] sm:$0xf]
  %v148 = vld [vmem:[%s5 + $0xc] sm:$0xf]
  %v149 = vld [vmem:[%s5 + $0x10] sm:$0xf]
  %v150 = vld [vmem:[%s5 + $0x14] sm:$0xf]
  %v151 = vld [vmem:[%s5 + $0x18] sm:$0xf]
  %v152 = vld [vmem:[%s5 + $0x1c] sm:$0xf]
  %v153 = vld [vmem:[%s5 + $0x20] sm:$0xf]
  %v154 = vld [vmem:[%s5 + $0x24] sm:$0xf]
  %v155 = vld [vmem:[%s5 + $0x28] sm:$0xf]
  %v156 = vld [vmem:[%s5 + $0x2c] sm:$0xf]
  %v157 = vld [vmem:[%s5 + $0x30] sm:$0xf]
  %v158 = vld [vmem:[%s5 + $0x34] sm:$0xf]
  %v159 = vld [vmem:[%s5 + $0x38] sm:$0xf]
  %v160 = vld [vmem:[%s5 + $0x3c] sm:$0xf]
  %v161 = vld [vmem:[%s6] sm:$0x1]
  %v163 = vperm.slane %v161, 0
  %v181 = vunpack.c.l.b16 %v145
  %v182 = vunpack.c.l.b16 %v146
  %v183 = vunpack.c.l.b16 %v147
  %v184 = vunpack.c.l.b16 %v148
  %v185 = vunpack.c.l.b16 %v149
  %v186 = vunpack.c.l.b16 %v150
  %v187 = vunpack.c.l.b16 %v151
  %v188 = vunpack.c.l.b16 %v152
  %v189 = vunpack.c.l.b16 %v153
  %v190 = vunpack.c.l.b16 %v154
  %v191 = vunpack.c.l.b16 %v155
  %v192 = vunpack.c.l.b16 %v156
  %v193 = vunpack.c.l.b16 %v157
  %v194 = vunpack.c.l.b16 %v158
  %v195 = vunpack.c.l.b16 %v159
  %v196 = vunpack.c.l.b16 %v160
  %v197 = vpack.c.b16 %v182, %v181
  %v198 = vpack.c.b16 %v184, %v183
  %v199 = vpack.c.b16 %v186, %v185
  %v200 = vpack.c.b16 %v188, %v187
  %v201 = vpack.c.b16 %v190, %v189
  %v202 = vpack.c.b16 %v192, %v191
  %v203 = vpack.c.b16 %v194, %v193
  %v204 = vpack.c.b16 %v196, %v195
  %213 = vmatpush.bf16.msra.mxu0 %v204
  %214 = vmatpush.bf16.msra.mxu0 %v203
  %215 = vmatpush.bf16.msra.mxu0 %v202
  %216 = vmatpush.bf16.msra.mxu0 %v201
  %217 = vmatpush.bf16.msra.mxu0 %v200
  %218 = vmatpush.bf16.msra.mxu0 %v199
  %219 = vmatpush.bf16.msra.mxu0 %v198
  %220 = vmatpush.bf16.msra.mxu0 %v197
  %221 = vmatmul.bf16.gmra.mxu0 %v144
  %v222 = vpop.f32.mrf.mxu0
  %v223 = vadd.f32 %v163, %v222
  %v224 = vpop.f32.mrf.mxu0
  %v225 = vadd.f32 %v163, %v224
  %226 = vdwg.mxu0
  %v227 = vpack.c.bf16 %v223, %v223
  %v228 = vpack.c.bf16 %v225, %v225
  %229 = vst [vmem:[%s7] sm:$0xf] %v227
  %230 = vst [vmem:[%s7 + $0x4] sm:$0xf] %v228
  // Predicated region
  $region30: #{dqn_forward.1} parent=0 // pred_check
    _
  $region31: #{dqn_forward.1} parent=0 // pred_check_branch
    %232 = sbr.rel (0) target = $region33
  $region32: #{dqn_forward.1} parent=0 // pred_region
    _
  $region33: #{dqn_forward.1} parent=0 // pred_fallthru
    _
  // Predicated region
  $region34: #{dqn_forward.1} parent=0 // pred_check
    _
  $region35: #{dqn_forward.1} parent=0 // pred_check_branch
    %234 = sbr.rel (0) target = $region37
  $region36: #{dqn_forward.1} parent=0 // pred_region
    _
  $region37: #{dqn_forward.1} parent=0 // pred_fallthru
    _

</llo_original>
